<compile_context>
chip_gen: v6e
topology: v6e:2x2x1
jax: 0.10.0
libtpu: 0.0.40
codegen_flags: <defaults>
</compile_context>

<pallas_src>
import functools

import jax
import jax.numpy as jnp
from jax.experimental import pallas as pl
from jax.experimental.pallas import tpu as pltpu


def _round_up(x, m):
    return ((x + m - 1) // m) * m


def _pick_chunk(T, max_tt=8):
    """Largest divisor of T that is <= max_tt (keeps the grid exact)."""
    tt = min(max_tt, T)
    while T % tt:
        tt -= 1
    return tt


def _rnn_seq_kernel(x_ref, h0_ref, w_ref, b_ref,
                    out_ref, hfin_ref, comb_ref,
                    *, tt, in_pad, out_pad):
    """One chunk of TT timesteps; hidden carried in the combined VMEM buffer."""
    c = pl.program_id(0)

    # Initialize the hidden lanes of the persistent combined buffer once.
    @pl.when(c == 0)
    def _():
        comb_ref[:, in_pad:] = h0_ref[...]

    w = w_ref[...]        # [in_pad + h_pad, out_pad + h_pad]  (resident)
    b = b_ref[...]        # [B_pad, out_pad + h_pad]           (resident, pre-broadcast)

    def step(t, carry):
        # Lane-dense 128-wide copy of x_t into the left lanes of `combined`.
        comb_ref[:, :in_pad] = x_ref[t]

        # Single fused MXU push: (i2o | i2h) in one K=256 matmul.
        fused = jnp.dot(comb_ref[...], w,
                        preferred_element_type=jnp.float32) + b   # [B_pad, n_pad]

        # New hidden (lane-padded to 128) -> right lanes of `combined`.
        comb_ref[:, in_pad:] = fused[:, out_pad:]

        # LogSoftmax over the logit lanes. Padded logit lanes already hold
        # ~-1e30 via the bias, so no explicit mask is needed; padded lanes of
        # the output hold garbage that the wrapper slices away.
        logits = fused[:, :out_pad]
        m = jnp.max(logits, axis=-1, keepdims=True)
        shifted = logits - m
        lse = jnp.log(jnp.sum(jnp.exp(shifted), axis=-1, keepdims=True))
        out_ref[t] = shifted - lse
        return carry

    jax.lax.fori_loop(0, tt, step, 0, unroll=min(tt, 8))

    # Final hidden only needs to be materialized once, at the last chunk.
    @pl.when(c == pl.num_programs(0) - 1)
    def _():
        hfin_ref[...] = comb_ref[:, in_pad:]


def _pack_params(params, in_size, h_size, out_size, b_pad):
    """Fuse i2o/i2h into one lane-padded weight + pre-broadcast masked bias."""
    in_pad = _round_up(in_size, 128)
    h_pad = _round_up(h_size, 128)
    out_pad = _round_up(out_size, 128)
    k_pad = in_pad + h_pad
    n_pad = out_pad + h_pad

    wo, wh = params["wo"], params["wh"]          # [in+h, out], [in+h, h]
    bo, bh = params["bo"], params["bh"]          # [1, out],    [1, h]

    w = jnp.zeros((k_pad, n_pad), jnp.float32)
    # rows multiplying the input
    w = w.at[:in_size, :out_size].set(wo[:in_size])
    w = w.at[:in_size, out_pad:out_pad + h_size].set(wh[:in_size])
    # rows multiplying the hidden state
    w = w.at[in_pad:in_pad + h_size, :out_size].set(wo[in_size:])
    w = w.at[in_pad:in_pad + h_size, out_pad:out_pad + h_size].set(wh[in_size:])

    # Bias with the logit-lane mask baked in (-1e30 in padded logit lanes;
    # finite so max/subtract never see -inf arithmetic). Pre-broadcast to
    # (B_pad, n_pad) so the kernel never re-broadcasts per step.
    b = jnp.zeros((1, n_pad), jnp.float32)
    b = b.at[:, :out_size].set(bo.reshape(1, out_size))
    b = b.at[:, out_size:out_pad].set(-1e30)
    b = b.at[:, out_pad:out_pad + h_size].set(bh.reshape(1, h_size))
    b = jnp.broadcast_to(b, (b_pad, n_pad))

    return w, b, in_pad, h_pad, out_pad, n_pad


def rnn_sequence_forward(xs, h0, params, max_steps_per_chunk=8):
    """Run the RNN over a sequence in a single Pallas kernel.

    xs: [T, B, in_size] f32, h0: [B, h_size] f32
    returns (log_probs [T, B, out_size], final_hidden [B, h_size])
    """
    T, B, in_size = xs.shape
    h_size = h0.shape[1]
    out_size = params["wo"].shape[1]

    b_pad = _round_up(max(B, 8), 8)
    w, b, in_pad, h_pad, out_pad, n_pad = _pack_params(
        params, in_size, h_size, out_size, b_pad)

    tt = _pick_chunk(T, max_steps_per_chunk)
    n_chunks = T // tt

    # Lane/sublane-pad inputs (zeros; the matching weight rows are zero too).
    xs_p = jnp.zeros((T, b_pad, in_pad), jnp.float32).at[:, :B, :in_size].set(xs)
    h0_p = jnp.zeros((b_pad, h_pad), jnp.float32).at[:B, :h_size].set(h0)

    kernel = functools.partial(_rnn_seq_kernel, tt=tt, in_pad=in_pad,
                               out_pad=out_pad)

    out_p, hfin_p = pl.pallas_call(
        kernel,
        grid=(n_chunks,),
        in_specs=[
            pl.BlockSpec((tt, b_pad, in_pad), lambda c: (c, 0, 0)),   # x chunk
            pl.BlockSpec((b_pad, h_pad), lambda c: (0, 0)),           # h0 (resident)
            pl.BlockSpec((in_pad + h_pad, n_pad), lambda c: (0, 0)),  # W fused (resident)
            pl.BlockSpec((b_pad, n_pad), lambda c: (0, 0)),           # bias (resident)
        ],
        out_specs=[
            pl.BlockSpec((tt, b_pad, out_pad), lambda c: (c, 0, 0)),  # log-prob slab
            pl.BlockSpec((b_pad, h_pad), lambda c: (0, 0)),           # final hidden
        ],
        out_shape=[
            jax.ShapeDtypeStruct((T, b_pad, out_pad), jnp.float32),
            jax.ShapeDtypeStruct((b_pad, h_pad), jnp.float32),
        ],
        scratch_shapes=[pltpu.VMEM((b_pad, in_pad + h_pad), jnp.float32)],
        compiler_params=pltpu.CompilerParams(
            dimension_semantics=("arbitrary",)),
    )(xs_p, h0_p, w, b)

    return out_p[:, :B, :out_size], hfin_p[:B, :h_size]


def rnn_forward(inp, hidden, params):
    """Single-cell forward matching the PyTorch module: (log_probs, new_hidden)."""
    log_probs, new_hidden = rnn_sequence_forward(inp[None], hidden, params)
    return log_probs[0], new_hidden


def init_params(key, in_size, h_size, out_size):
    """nn.Linear default init: U(-1/sqrt(fan_in), 1/sqrt(fan_in)); W stored as [fan_in, fan_out]."""
    fan_in = in_size + h_size
    bound = 1.0 / jnp.sqrt(jnp.float32(fan_in))
    k1, k2, k3, k4 = jax.random.split(key, 4)
    wo = jax.random.uniform(k1, (fan_in, out_size), jnp.float32, -bound, bound)
    bo = jax.random.uniform(k2, (1, out_size), jnp.float32, -bound, bound)
    wh = jax.random.uniform(k3, (fan_in, h_size), jnp.float32, -bound, bound)
    bh = jax.random.uniform(k4, (1, h_size), jnp.float32, -bound, bound)
    return {"wo": wo, "bo": bo, "wh": wh, "bh": bh}


if __name__ == "__main__":
    in_size, h_size, out_size = 16, 32, 8
    batch, seq_len = 2, 8

    key = jax.random.PRNGKey(0)
    kp, kx = jax.random.split(key)
    params = init_params(kp, in_size, h_size, out_size)

    xs = jax.random.normal(kx, (seq_len, batch, in_size), jnp.float32)
    h0 = jnp.zeros((batch, h_size), jnp.float32)   # create_init_hidden_state per row

    # Fused-sequence Pallas kernel.
    log_probs, h_final = jax.jit(rnn_sequence_forward)(xs, h0, params)
    jax.block_until_ready((log_probs, h_final))

    # Pure-JAX reference (mirrors the PyTorch module exactly).
    def ref_cell(x, h, p):
        comb = jnp.concatenate([x, h], axis=1)
        out = jax.nn.log_softmax(comb @ p["wo"] + p["bo"], axis=1)
        new_h = comb @ p["wh"] + p["bh"]
        return out, new_h

    def ref_seq(xs, h0, p):
        def step(h, x):
            o, h2 = ref_cell(x, h, p)
            return h2, o
        hf, os = jax.lax.scan(step, h0, xs)
        return os, hf

    ref_out, ref_hf = jax.jit(ref_seq)(xs, h0, params)

    assert log_probs.shape == (seq_len, batch, out_size)
    assert h_final.shape == (batch, h_size)
    assert jnp.allclose(jnp.sum(jnp.exp(log_probs), axis=-1), 1.0, atol=1e-5)
    # Loose tolerance: default TPU matmul precision (f32 via bf16 passes)
    # differs slightly between the Mosaic kernel and the XLA reference.
    assert jnp.allclose(log_probs, ref_out, atol=5e-2, rtol=5e-2)
    assert jnp.allclose(h_final, ref_hf, atol=5e-2, rtol=5e-2)

    # Single-cell forward (exact PyTorch forward signature) also goes through
    # the same kernel with T=1.
    out1, h1 = jax.jit(rnn_forward)(xs[0], h0, params)
    jax.block_until_ready((out1, h1))
    r_out1, r_h1 = ref_cell(xs[0], h0, params)
    assert out1.shape == (batch, out_size) and h1.shape == (batch, h_size)
    assert jnp.allclose(out1, r_out1, atol=5e-2, rtol=5e-2)
    assert jnp.allclose(h1, r_h1, atol=5e-2, rtol=5e-2)

    print("KERNEL_OK")
</pallas_src>

<mosaic_0001>
module attributes {stable_mosaic.version = 11 : i64} {
  func.func @_rnn_seq_kernel(%arg0: i32, %arg1: memref<8x8x128xf32, #tpu.memory_space<vmem>>, %arg2: memref<8x128xf32, #tpu.memory_space<vmem>>, %arg3: memref<256x256xf32, #tpu.memory_space<vmem>>, %arg4: memref<8x256xf32, #tpu.memory_space<vmem>>, %arg5: memref<8x8x128xf32, #tpu.memory_space<vmem>>, %arg6: memref<8x128xf32, #tpu.memory_space<vmem>>, %arg7: memref<8x256xf32, #tpu.memory_space<vmem>>) attributes {dimension_semantics = [#tpu.dimension_semantics<arbitrary>], iteration_bounds = array<i64: 1>, scalar_prefetch = 0 : i64, scratch_operands = 1 : i64, tpu.core_type = #tpu.core_type<tc>, window_params = [{transform_indices = @transform_0, window_bounds = array<i64: 8, 8, 128>}, {pipeline_mode = #tpu.pipeline_mode<synchronous>, transform_indices = @transform_1, window_bounds = array<i64: 8, 128>}, {pipeline_mode = #tpu.pipeline_mode<synchronous>, transform_indices = @transform_2, window_bounds = array<i64: 256, 256>}, {pipeline_mode = #tpu.pipeline_mode<synchronous>, transform_indices = @transform_3, window_bounds = array<i64: 8, 256>}, {transform_indices = @transform_4, window_bounds = array<i64: 8, 8, 128>}, {pipeline_mode = #tpu.pipeline_mode<synchronous>, transform_indices = @transform_5, window_bounds = array<i64: 8, 128>}]} {
    %c0_i32 = arith.constant 0 : i32
    %0 = arith.cmpi eq, %arg0, %c0_i32 : i32
    %1 = arith.extui %0 : i1 to i32
    %c0_i32_0 = arith.constant 0 : i32
    %2 = arith.cmpi ne, %1, %c0_i32_0 : i32
    scf.if %2 {
      %c0_109 = arith.constant 0 : index
      %c0_110 = arith.constant 0 : index
      %200 = vector.load %arg2[%c0_109, %c0_110] : memref<8x128xf32, #tpu.memory_space<vmem>>, vector<8x128xf32>
      %c0_111 = arith.constant 0 : index
      %c128_112 = arith.constant 128 : index
      %201 = vector.load %arg7[%c0_111, %c128_112] : memref<8x256xf32, #tpu.memory_space<vmem>>, vector<8x128xf32>
      tpu.vector_store %arg7[%c0_111, %c128_112], %200 {strides = array<i32>} : memref<8x256xf32, #tpu.memory_space<vmem>>, vector<8x128xf32>,
    } else {
    }
    %c0 = arith.constant 0 : index
    %c0_1 = arith.constant 0 : index
    %3 = vector.load %arg3[%c0, %c0_1] : memref<256x256xf32, #tpu.memory_space<vmem>>, vector<256x256xf32>
    %c0_2 = arith.constant 0 : index
    %c0_3 = arith.constant 0 : index
    %4 = vector.load %arg4[%c0_2, %c0_3] : memref<8x256xf32, #tpu.memory_space<vmem>>, vector<8x256xf32>
    %c0_i32_4 = arith.constant 0 : i32
    %5 = arith.index_cast %c0_i32_4 : i32 to index
    %c0_5 = arith.constant 0 : index
    %c0_6 = arith.constant 0 : index
    %6 = vector.load %arg1[%5, %c0_5, %c0_6] : memref<8x8x128xf32, #tpu.memory_space<vmem>>, vector<1x8x128xf32>
    %7 = vector.shape_cast %6 : vector<1x8x128xf32> to vector<8x128xf32>
    %c0_7 = arith.constant 0 : index
    %c0_8 = arith.constant 0 : index
    %8 = vector.load %arg7[%c0_7, %c0_8] : memref<8x256xf32, #tpu.memory_space<vmem>>, vector<8x128xf32>
    tpu.vector_store %arg7[%c0_7, %c0_8], %7 {strides = array<i32>} : memref<8x256xf32, #tpu.memory_space<vmem>>, vector<8x128xf32>,
    %c0_9 = arith.constant 0 : index
    %c0_10 = arith.constant 0 : index
    %9 = vector.load %arg7[%c0_9, %c0_10] : memref<8x256xf32, #tpu.memory_space<vmem>>, vector<8x256xf32>
    %cst = arith.constant dense<0.000000e+00> : vector<8x256xf32>
    %10 = tpu.matmul %9, %3, %cst {dimension_numbers = #tpu.dot_dimension_numbers<[1], [0], [0], [1], [0, 0, 1, 1], [], []>} : vector<8x256xf32>, vector<256x256xf32>, vector<8x256xf32> -> vector<8x256xf32>
    %11 = arith.addf %10, %4 : vector<8x256xf32>
    %12 = vector.extract_strided_slice %11 {offsets = [0, 128], sizes = [8, 128], strides = [1, 1]} : vector<8x256xf32> to vector<8x128xf32>
    %c0_11 = arith.constant 0 : index
    %c128 = arith.constant 128 : index
    %13 = vector.load %arg7[%c0_11, %c128] : memref<8x256xf32, #tpu.memory_space<vmem>>, vector<8x128xf32>
    tpu.vector_store %arg7[%c0_11, %c128], %12 {strides = array<i32>} : memref<8x256xf32, #tpu.memory_space<vmem>>, vector<8x128xf32>,
    %14 = vector.extract_strided_slice %11 {offsets = [0, 0], sizes = [8, 128], strides = [1, 1]} : vector<8x256xf32> to vector<8x128xf32>
    %cst_12 = arith.constant dense<0xFF800000> : vector<8xf32>
    %15 = vector.multi_reduction <maximumf>, %14, %cst_12 [1] : vector<8x128xf32> to vector<8xf32>
    %16 = vector.shape_cast %15 : vector<8xf32> to vector<8x1xf32>
    %17 = vector.broadcast %16 : vector<8x1xf32> to vector<8x128xf32>
    %18 = arith.subf %14, %17 : vector<8x128xf32>
    %19 = math.exp %18 : vector<8x128xf32>
    %cst_13 = arith.constant dense<0.000000e+00> : vector<8xf32>
    %20 = vector.multi_reduction <add>, %19, %cst_13 [1] : vector<8x128xf32> to vector<8xf32>
    %21 = vector.shape_cast %20 : vector<8xf32> to vector<8x1xf32>
    %22 = math.log %21 : vector<8x1xf32>
    %23 = vector.broadcast %22 : vector<8x1xf32> to vector<8x128xf32>
    %24 = arith.subf %18, %23 : vector<8x128xf32>
    %25 = arith.index_cast %c0_i32_4 : i32 to index
    %c0_14 = arith.constant 0 : index
    %c0_15 = arith.constant 0 : index
    %26 = vector.load %arg5[%25, %c0_14, %c0_15] : memref<8x8x128xf32, #tpu.memory_space<vmem>>, vector<1x8x128xf32>
    %27 = vector.shape_cast %26 : vector<1x8x128xf32> to vector<8x128xf32>
    %28 = vector.shape_cast %24 : vector<8x128xf32> to vector<1x8x128xf32>
    tpu.vector_store %arg5[%25, %c0_14, %c0_15], %28 {strides = array<i32>} : memref<8x8x128xf32, #tpu.memory_space<vmem>>, vector<1x8x128xf32>,
    %c1_i32 = arith.constant 1 : i32
    %29 = arith.index_cast %c1_i32 : i32 to index
    %c0_16 = arith.constant 0 : index
    %c0_17 = arith.constant 0 : index
    %30 = vector.load %arg1[%29, %c0_16, %c0_17] : memref<8x8x128xf32, #tpu.memory_space<vmem>>, vector<1x8x128xf32>
    %31 = vector.shape_cast %30 : vector<1x8x128xf32> to vector<8x128xf32>
    %c0_18 = arith.constant 0 : index
    %c0_19 = arith.constant 0 : index
    %32 = vector.load %arg7[%c0_18, %c0_19] : memref<8x256xf32, #tpu.memory_space<vmem>>, vector<8x128xf32>
    tpu.vector_store %arg7[%c0_18, %c0_19], %31 {strides = array<i32>} : memref<8x256xf32, #tpu.memory_space<vmem>>, vector<8x128xf32>,
    %c0_20 = arith.constant 0 : index
    %c0_21 = arith.constant 0 : index
    %33 = vector.load %arg7[%c0_20, %c0_21] : memref<8x256xf32, #tpu.memory_space<vmem>>, vector<8x256xf32>
    %cst_22 = arith.constant dense<0.000000e+00> : vector<8x256xf32>
    %34 = tpu.matmul %33, %3, %cst_22 {dimension_numbers = #tpu.dot_dimension_numbers<[1], [0], [0], [1], [0, 0, 1, 1], [], []>} : vector<8x256xf32>, vector<256x256xf32>, vector<8x256xf32> -> vector<8x256xf32>
    %35 = arith.addf %34, %4 : vector<8x256xf32>
    %36 = vector.extract_strided_slice %35 {offsets = [0, 128], sizes = [8, 128], strides = [1, 1]} : vector<8x256xf32> to vector<8x128xf32>
    %c0_23 = arith.constant 0 : index
    %c128_24 = arith.constant 128 : index
    %37 = vector.load %arg7[%c0_23, %c128_24] : memref<8x256xf32, #tpu.memory_space<vmem>>, vector<8x128xf32>
    tpu.vector_store %arg7[%c0_23, %c128_24], %36 {strides = array<i32>} : memref<8x256xf32, #tpu.memory_space<vmem>>, vector<8x128xf32>,
    %38 = vector.extract_strided_slice %35 {offsets = [0, 0], sizes = [8, 128], strides = [1, 1]} : vector<8x256xf32> to vector<8x128xf32>
    %cst_25 = arith.constant dense<0xFF800000> : vector<8xf32>
    %39 = vector.multi_reduction <maximumf>, %38, %cst_25 [1] : vector<8x128xf32> to vector<8xf32>
    %40 = vector.shape_cast %39 : vector<8xf32> to vector<8x1xf32>
    %41 = vector.broadcast %40 : vector<8x1xf32> to vector<8x128xf32>
    %42 = arith.subf %38, %41 : vector<8x128xf32>
    %43 = math.exp %42 : vector<8x128xf32>
    %cst_26 = arith.constant dense<0.000000e+00> : vector<8xf32>
    %44 = vector.multi_reduction <add>, %43, %cst_26 [1] : vector<8x128xf32> to vector<8xf32>
    %45 = vector.shape_cast %44 : vector<8xf32> to vector<8x1xf32>
    %46 = math.log %45 : vector<8x1xf32>
    %47 = vector.broadcast %46 : vector<8x1xf32> to vector<8x128xf32>
    %48 = arith.subf %42, %47 : vector<8x128xf32>
    %49 = arith.index_cast %c1_i32 : i32 to index
    %c0_27 = arith.constant 0 : index
    %c0_28 = arith.constant 0 : index
    %50 = vector.load %arg5[%49, %c0_27, %c0_28] : memref<8x8x128xf32, #tpu.memory_space<vmem>>, vector<1x8x128xf32>
    %51 = vector.shape_cast %50 : vector<1x8x128xf32> to vector<8x128xf32>
    %52 = vector.shape_cast %48 : vector<8x128xf32> to vector<1x8x128xf32>
    tpu.vector_store %arg5[%49, %c0_27, %c0_28], %52 {strides = array<i32>} : memref<8x8x128xf32, #tpu.memory_space<vmem>>, vector<1x8x128xf32>,
    %c2_i32 = arith.constant 2 : i32
    %53 = arith.index_cast %c2_i32 : i32 to index
    %c0_29 = arith.constant 0 : index
    %c0_30 = arith.constant 0 : index
    %54 = vector.load %arg1[%53, %c0_29, %c0_30] : memref<8x8x128xf32, #tpu.memory_space<vmem>>, vector<1x8x128xf32>
    %55 = vector.shape_cast %54 : vector<1x8x128xf32> to vector<8x128xf32>
    %c0_31 = arith.constant 0 : index
    %c0_32 = arith.constant 0 : index
    %56 = vector.load %arg7[%c0_31, %c0_32] : memref<8x256xf32, #tpu.memory_space<vmem>>, vector<8x128xf32>
    tpu.vector_store %arg7[%c0_31, %c0_32], %55 {strides = array<i32>} : memref<8x256xf32, #tpu.memory_space<vmem>>, vector<8x128xf32>,
    %c0_33 = arith.constant 0 : index
    %c0_34 = arith.constant 0 : index
    %57 = vector.load %arg7[%c0_33, %c0_34] : memref<8x256xf32, #tpu.memory_space<vmem>>, vector<8x256xf32>
    %cst_35 = arith.constant dense<0.000000e+00> : vector<8x256xf32>
    %58 = tpu.matmul %57, %3, %cst_35 {dimension_numbers = #tpu.dot_dimension_numbers<[1], [0], [0], [1], [0, 0, 1, 1], [], []>} : vector<8x256xf32>, vector<256x256xf32>, vector<8x256xf32> -> vector<8x256xf32>
    %59 = arith.addf %58, %4 : vector<8x256xf32>
    %60 = vector.extract_strided_slice %59 {offsets = [0, 128], sizes = [8, 128], strides = [1, 1]} : vector<8x256xf32> to vector<8x128xf32>
    %c0_36 = arith.constant 0 : index
    %c128_37 = arith.constant 128 : index
    %61 = vector.load %arg7[%c0_36, %c128_37] : memref<8x256xf32, #tpu.memory_space<vmem>>, vector<8x128xf32>
    tpu.vector_store %arg7[%c0_36, %c128_37], %60 {strides = array<i32>} : memref<8x256xf32, #tpu.memory_space<vmem>>, vector<8x128xf32>,
    %62 = vector.extract_strided_slice %59 {offsets = [0, 0], sizes = [8, 128], strides = [1, 1]} : vector<8x256xf32> to vector<8x128xf32>
    %cst_38 = arith.constant dense<0xFF800000> : vector<8xf32>
    %63 = vector.multi_reduction <maximumf>, %62, %cst_38 [1] : vector<8x128xf32> to vector<8xf32>
    %64 = vector.shape_cast %63 : vector<8xf32> to vector<8x1xf32>
    %65 = vector.broadcast %64 : vector<8x1xf32> to vector<8x128xf32>
    %66 = arith.subf %62, %65 : vector<8x128xf32>
    %67 = math.exp %66 : vector<8x128xf32>
    %cst_39 = arith.constant dense<0.000000e+00> : vector<8xf32>
    %68 = vector.multi_reduction <add>, %67, %cst_39 [1] : vector<8x128xf32> to vector<8xf32>
    %69 = vector.shape_cast %68 : vector<8xf32> to vector<8x1xf32>
    %70 = math.log %69 : vector<8x1xf32>
    %71 = vector.broadcast %70 : vector<8x1xf32> to vector<8x128xf32>
    %72 = arith.subf %66, %71 : vector<8x128xf32>
    %73 = arith.index_cast %c2_i32 : i32 to index
    %c0_40 = arith.constant 0 : index
    %c0_41 = arith.constant 0 : index
    %74 = vector.load %arg5[%73, %c0_40, %c0_41] : memref<8x8x128xf32, #tpu.memory_space<vmem>>, vector<1x8x128xf32>
    %75 = vector.shape_cast %74 : vector<1x8x128xf32> to vector<8x128xf32>
    %76 = vector.shape_cast %72 : vector<8x128xf32> to vector<1x8x128xf32>
    tpu.vector_store %arg5[%73, %c0_40, %c0_41], %76 {strides = array<i32>} : memref<8x8x128xf32, #tpu.memory_space<vmem>>, vector<1x8x128xf32>,
    %c3_i32 = arith.constant 3 : i32
    %77 = arith.index_cast %c3_i32 : i32 to index
    %c0_42 = arith.constant 0 : index
    %c0_43 = arith.constant 0 : index
    %78 = vector.load %arg1[%77, %c0_42, %c0_43] : memref<8x8x128xf32, #tpu.memory_space<vmem>>, vector<1x8x128xf32>
    %79 = vector.shape_cast %78 : vector<1x8x128xf32> to vector<8x128xf32>
    %c0_44 = arith.constant 0 : index
    %c0_45 = arith.constant 0 : index
    %80 = vector.load %arg7[%c0_44, %c0_45] : memref<8x256xf32, #tpu.memory_space<vmem>>, vector<8x128xf32>
    tpu.vector_store %arg7[%c0_44, %c0_45], %79 {strides = array<i32>} : memref<8x256xf32, #tpu.memory_space<vmem>>, vector<8x128xf32>,
    %c0_46 = arith.constant 0 : index
    %c0_47 = arith.constant 0 : index
    %81 = vector.load %arg7[%c0_46, %c0_47] : memref<8x256xf32, #tpu.memory_space<vmem>>, vector<8x256xf32>
    %cst_48 = arith.constant dense<0.000000e+00> : vector<8x256xf32>
    %82 = tpu.matmul %81, %3, %cst_48 {dimension_numbers = #tpu.dot_dimension_numbers<[1], [0], [0], [1], [0, 0, 1, 1], [], []>} : vector<8x256xf32>, vector<256x256xf32>, vector<8x256xf32> -> vector<8x256xf32>
    %83 = arith.addf %82, %4 : vector<8x256xf32>
    %84 = vector.extract_strided_slice %83 {offsets = [0, 128], sizes = [8, 128], strides = [1, 1]} : vector<8x256xf32> to vector<8x128xf32>
    %c0_49 = arith.constant 0 : index
    %c128_50 = arith.constant 128 : index
    %85 = vector.load %arg7[%c0_49, %c128_50] : memref<8x256xf32, #tpu.memory_space<vmem>>, vector<8x128xf32>
    tpu.vector_store %arg7[%c0_49, %c128_50], %84 {strides = array<i32>} : memref<8x256xf32, #tpu.memory_space<vmem>>, vector<8x128xf32>,
    %86 = vector.extract_strided_slice %83 {offsets = [0, 0], sizes = [8, 128], strides = [1, 1]} : vector<8x256xf32> to vector<8x128xf32>
    %cst_51 = arith.constant dense<0xFF800000> : vector<8xf32>
    %87 = vector.multi_reduction <maximumf>, %86, %cst_51 [1] : vector<8x128xf32> to vector<8xf32>
    %88 = vector.shape_cast %87 : vector<8xf32> to vector<8x1xf32>
    %89 = vector.broadcast %88 : vector<8x1xf32> to vector<8x128xf32>
    %90 = arith.subf %86, %89 : vector<8x128xf32>
    %91 = math.exp %90 : vector<8x128xf32>
    %cst_52 = arith.constant dense<0.000000e+00> : vector<8xf32>
    %92 = vector.multi_reduction <add>, %91, %cst_52 [1] : vector<8x128xf32> to vector<8xf32>
    %93 = vector.shape_cast %92 : vector<8xf32> to vector<8x1xf32>
    %94 = math.log %93 : vector<8x1xf32>
    %95 = vector.broadcast %94 : vector<8x1xf32> to vector<8x128xf32>
    %96 = arith.subf %90, %95 : vector<8x128xf32>
    %97 = arith.index_cast %c3_i32 : i32 to index
    %c0_53 = arith.constant 0 : index
    %c0_54 = arith.constant 0 : index
    %98 = vector.load %arg5[%97, %c0_53, %c0_54] : memref<8x8x128xf32, #tpu.memory_space<vmem>>, vector<1x8x128xf32>
    %99 = vector.shape_cast %98 : vector<1x8x128xf32> to vector<8x128xf32>
    %100 = vector.shape_cast %96 : vector<8x128xf32> to vector<1x8x128xf32>
    tpu.vector_store %arg5[%97, %c0_53, %c0_54], %100 {strides = array<i32>} : memref<8x8x128xf32, #tpu.memory_space<vmem>>, vector<1x8x128xf32>,
    %c4_i32 = arith.constant 4 : i32
    %101 = arith.index_cast %c4_i32 : i32 to index
    %c0_55 = arith.constant 0 : index
    %c0_56 = arith.constant 0 : index
    %102 = vector.load %arg1[%101, %c0_55, %c0_56] : memref<8x8x128xf32, #tpu.memory_space<vmem>>, vector<1x8x128xf32>
    %103 = vector.shape_cast %102 : vector<1x8x128xf32> to vector<8x128xf32>
    %c0_57 = arith.constant 0 : index
    %c0_58 = arith.constant 0 : index
    %104 = vector.load %arg7[%c0_57, %c0_58] : memref<8x256xf32, #tpu.memory_space<vmem>>, vector<8x128xf32>
    tpu.vector_store %arg7[%c0_57, %c0_58], %103 {strides = array<i32>} : memref<8x256xf32, #tpu.memory_space<vmem>>, vector<8x128xf32>,
    %c0_59 = arith.constant 0 : index
    %c0_60 = arith.constant 0 : index
    %105 = vector.load %arg7[%c0_59, %c0_60] : memref<8x256xf32, #tpu.memory_space<vmem>>, vector<8x256xf32>
    %cst_61 = arith.constant dense<0.000000e+00> : vector<8x256xf32>
    %106 = tpu.matmul %105, %3, %cst_61 {dimension_numbers = #tpu.dot_dimension_numbers<[1], [0], [0], [1], [0, 0, 1, 1], [], []>} : vector<8x256xf32>, vector<256x256xf32>, vector<8x256xf32> -> vector<8x256xf32>
    %107 = arith.addf %106, %4 : vector<8x256xf32>
    %108 = vector.extract_strided_slice %107 {offsets = [0, 128], sizes = [8, 128], strides = [1, 1]} : vector<8x256xf32> to vector<8x128xf32>
    %c0_62 = arith.constant 0 : index
    %c128_63 = arith.constant 128 : index
    %109 = vector.load %arg7[%c0_62, %c128_63] : memref<8x256xf32, #tpu.memory_space<vmem>>, vector<8x128xf32>
    tpu.vector_store %arg7[%c0_62, %c128_63], %108 {strides = array<i32>} : memref<8x256xf32, #tpu.memory_space<vmem>>, vector<8x128xf32>,
    %110 = vector.extract_strided_slice %107 {offsets = [0, 0], sizes = [8, 128], strides = [1, 1]} : vector<8x256xf32> to vector<8x128xf32>
    %cst_64 = arith.constant dense<0xFF800000> : vector<8xf32>
    %111 = vector.multi_reduction <maximumf>, %110, %cst_64 [1] : vector<8x128xf32> to vector<8xf32>
    %112 = vector.shape_cast %111 : vector<8xf32> to vector<8x1xf32>
    %113 = vector.broadcast %112 : vector<8x1xf32> to vector<8x128xf32>
    %114 = arith.subf %110, %113 : vector<8x128xf32>
    %115 = math.exp %114 : vector<8x128xf32>
    %cst_65 = arith.constant dense<0.000000e+00> : vector<8xf32>
    %116 = vector.multi_reduction <add>, %115, %cst_65 [1] : vector<8x128xf32> to vector<8xf32>
    %117 = vector.shape_cast %116 : vector<8xf32> to vector<8x1xf32>
    %118 = math.log %117 : vector<8x1xf32>
    %119 = vector.broadcast %118 : vector<8x1xf32> to vector<8x128xf32>
    %120 = arith.subf %114, %119 : vector<8x128xf32>
    %121 = arith.index_cast %c4_i32 : i32 to index
    %c0_66 = arith.constant 0 : index
    %c0_67 = arith.constant 0 : index
    %122 = vector.load %arg5[%121, %c0_66, %c0_67] : memref<8x8x128xf32, #tpu.memory_space<vmem>>, vector<1x8x128xf32>
    %123 = vector.shape_cast %122 : vector<1x8x128xf32> to vector<8x128xf32>
    %124 = vector.shape_cast %120 : vector<8x128xf32> to vector<1x8x128xf32>
    tpu.vector_store %arg5[%121, %c0_66, %c0_67], %124 {strides = array<i32>} : memref<8x8x128xf32, #tpu.memory_space<vmem>>, vector<1x8x128xf32>,
    %c5_i32 = arith.constant 5 : i32
    %125 = arith.index_cast %c5_i32 : i32 to index
    %c0_68 = arith.constant 0 : index
    %c0_69 = arith.constant 0 : index
    %126 = vector.load %arg1[%125, %c0_68, %c0_69] : memref<8x8x128xf32, #tpu.memory_space<vmem>>, vector<1x8x128xf32>
    %127 = vector.shape_cast %126 : vector<1x8x128xf32> to vector<8x128xf32>
    %c0_70 = arith.constant 0 : index
    %c0_71 = arith.constant 0 : index
    %128 = vector.load %arg7[%c0_70, %c0_71] : memref<8x256xf32, #tpu.memory_space<vmem>>, vector<8x128xf32>
    tpu.vector_store %arg7[%c0_70, %c0_71], %127 {strides = array<i32>} : memref<8x256xf32, #tpu.memory_space<vmem>>, vector<8x128xf32>,
    %c0_72 = arith.constant 0 : index
    %c0_73 = arith.constant 0 : index
    %129 = vector.load %arg7[%c0_72, %c0_73] : memref<8x256xf32, #tpu.memory_space<vmem>>, vector<8x256xf32>
    %cst_74 = arith.constant dense<0.000000e+00> : vector<8x256xf32>
    %130 = tpu.matmul %129, %3, %cst_74 {dimension_numbers = #tpu.dot_dimension_numbers<[1], [0], [0], [1], [0, 0, 1, 1], [], []>} : vector<8x256xf32>, vector<256x256xf32>, vector<8x256xf32> -> vector<8x256xf32>
    %131 = arith.addf %130, %4 : vector<8x256xf32>
    %132 = vector.extract_strided_slice %131 {offsets = [0, 128], sizes = [8, 128], strides = [1, 1]} : vector<8x256xf32> to vector<8x128xf32>
    %c0_75 = arith.constant 0 : index
    %c128_76 = arith.constant 128 : index
    %133 = vector.load %arg7[%c0_75, %c128_76] : memref<8x256xf32, #tpu.memory_space<vmem>>, vector<8x128xf32>
    tpu.vector_store %arg7[%c0_75, %c128_76], %132 {strides = array<i32>} : memref<8x256xf32, #tpu.memory_space<vmem>>, vector<8x128xf32>,
    %134 = vector.extract_strided_slice %131 {offsets = [0, 0], sizes = [8, 128], strides = [1, 1]} : vector<8x256xf32> to vector<8x128xf32>
    %cst_77 = arith.constant dense<0xFF800000> : vector<8xf32>
    %135 = vector.multi_reduction <maximumf>, %134, %cst_77 [1] : vector<8x128xf32> to vector<8xf32>
    %136 = vector.shape_cast %135 : vector<8xf32> to vector<8x1xf32>
    %137 = vector.broadcast %136 : vector<8x1xf32> to vector<8x128xf32>
    %138 = arith.subf %134, %137 : vector<8x128xf32>
    %139 = math.exp %138 : vector<8x128xf32>
    %cst_78 = arith.constant dense<0.000000e+00> : vector<8xf32>
    %140 = vector.multi_reduction <add>, %139, %cst_78 [1] : vector<8x128xf32> to vector<8xf32>
    %141 = vector.shape_cast %140 : vector<8xf32> to vector<8x1xf32>
    %142 = math.log %141 : vector<8x1xf32>
    %143 = vector.broadcast %142 : vector<8x1xf32> to vector<8x128xf32>
    %144 = arith.subf %138, %143 : vector<8x128xf32>
    %145 = arith.index_cast %c5_i32 : i32 to index
    %c0_79 = arith.constant 0 : index
    %c0_80 = arith.constant 0 : index
    %146 = vector.load %arg5[%145, %c0_79, %c0_80] : memref<8x8x128xf32, #tpu.memory_space<vmem>>, vector<1x8x128xf32>
    %147 = vector.shape_cast %146 : vector<1x8x128xf32> to vector<8x128xf32>
    %148 = vector.shape_cast %144 : vector<8x128xf32> to vector<1x8x128xf32>
    tpu.vector_store %arg5[%145, %c0_79, %c0_80], %148 {strides = array<i32>} : memref<8x8x128xf32, #tpu.memory_space<vmem>>, vector<1x8x128xf32>,
    %c6_i32 = arith.constant 6 : i32
    %149 = arith.index_cast %c6_i32 : i32 to index
    %c0_81 = arith.constant 0 : index
    %c0_82 = arith.constant 0 : index
    %150 = vector.load %arg1[%149, %c0_81, %c0_82] : memref<8x8x128xf32, #tpu.memory_space<vmem>>, vector<1x8x128xf32>
    %151 = vector.shape_cast %150 : vector<1x8x128xf32> to vector<8x128xf32>
    %c0_83 = arith.constant 0 : index
    %c0_84 = arith.constant 0 : index
    %152 = vector.load %arg7[%c0_83, %c0_84] : memref<8x256xf32, #tpu.memory_space<vmem>>, vector<8x128xf32>
    tpu.vector_store %arg7[%c0_83, %c0_84], %151 {strides = array<i32>} : memref<8x256xf32, #tpu.memory_space<vmem>>, vector<8x128xf32>,
    %c0_85 = arith.constant 0 : index
    %c0_86 = arith.constant 0 : index
    %153 = vector.load %arg7[%c0_85, %c0_86] : memref<8x256xf32, #tpu.memory_space<vmem>>, vector<8x256xf32>
    %cst_87 = arith.constant dense<0.000000e+00> : vector<8x256xf32>
    %154 = tpu.matmul %153, %3, %cst_87 {dimension_numbers = #tpu.dot_dimension_numbers<[1], [0], [0], [1], [0, 0, 1, 1], [], []>} : vector<8x256xf32>, vector<256x256xf32>, vector<8x256xf32> -> vector<8x256xf32>
    %155 = arith.addf %154, %4 : vector<8x256xf32>
    %156 = vector.extract_strided_slice %155 {offsets = [0, 128], sizes = [8, 128], strides = [1, 1]} : vector<8x256xf32> to vector<8x128xf32>
    %c0_88 = arith.constant 0 : index
    %c128_89 = arith.constant 128 : index
    %157 = vector.load %arg7[%c0_88, %c128_89] : memref<8x256xf32, #tpu.memory_space<vmem>>, vector<8x128xf32>
    tpu.vector_store %arg7[%c0_88, %c128_89], %156 {strides = array<i32>} : memref<8x256xf32, #tpu.memory_space<vmem>>, vector<8x128xf32>,
    %158 = vector.extract_strided_slice %155 {offsets = [0, 0], sizes = [8, 128], strides = [1, 1]} : vector<8x256xf32> to vector<8x128xf32>
    %cst_90 = arith.constant dense<0xFF800000> : vector<8xf32>
    %159 = vector.multi_reduction <maximumf>, %158, %cst_90 [1] : vector<8x128xf32> to vector<8xf32>
    %160 = vector.shape_cast %159 : vector<8xf32> to vector<8x1xf32>
    %161 = vector.broadcast %160 : vector<8x1xf32> to vector<8x128xf32>
    %162 = arith.subf %158, %161 : vector<8x128xf32>
    %163 = math.exp %162 : vector<8x128xf32>
    %cst_91 = arith.constant dense<0.000000e+00> : vector<8xf32>
    %164 = vector.multi_reduction <add>, %163, %cst_91 [1] : vector<8x128xf32> to vector<8xf32>
    %165 = vector.shape_cast %164 : vector<8xf32> to vector<8x1xf32>
    %166 = math.log %165 : vector<8x1xf32>
    %167 = vector.broadcast %166 : vector<8x1xf32> to vector<8x128xf32>
    %168 = arith.subf %162, %167 : vector<8x128xf32>
    %169 = arith.index_cast %c6_i32 : i32 to index
    %c0_92 = arith.constant 0 : index
    %c0_93 = arith.constant 0 : index
    %170 = vector.load %arg5[%169, %c0_92, %c0_93] : memref<8x8x128xf32, #tpu.memory_space<vmem>>, vector<1x8x128xf32>
    %171 = vector.shape_cast %170 : vector<1x8x128xf32> to vector<8x128xf32>
    %172 = vector.shape_cast %168 : vector<8x128xf32> to vector<1x8x128xf32>
    tpu.vector_store %arg5[%169, %c0_92, %c0_93], %172 {strides = array<i32>} : memref<8x8x128xf32, #tpu.memory_space<vmem>>, vector<1x8x128xf32>,
    %c7_i32 = arith.constant 7 : i32
    %173 = arith.index_cast %c7_i32 : i32 to index
    %c0_94 = arith.constant 0 : index
    %c0_95 = arith.constant 0 : index
    %174 = vector.load %arg1[%173, %c0_94, %c0_95] : memref<8x8x128xf32, #tpu.memory_space<vmem>>, vector<1x8x128xf32>
    %175 = vector.shape_cast %174 : vector<1x8x128xf32> to vector<8x128xf32>
    %c0_96 = arith.constant 0 : index
    %c0_97 = arith.constant 0 : index
    %176 = vector.load %arg7[%c0_96, %c0_97] : memref<8x256xf32, #tpu.memory_space<vmem>>, vector<8x128xf32>
    tpu.vector_store %arg7[%c0_96, %c0_97], %175 {strides = array<i32>} : memref<8x256xf32, #tpu.memory_space<vmem>>, vector<8x128xf32>,
    %c0_98 = arith.constant 0 : index
    %c0_99 = arith.constant 0 : index
    %177 = vector.load %arg7[%c0_98, %c0_99] : memref<8x256xf32, #tpu.memory_space<vmem>>, vector<8x256xf32>
    %cst_100 = arith.constant dense<0.000000e+00> : vector<8x256xf32>
    %178 = tpu.matmul %177, %3, %cst_100 {dimension_numbers = #tpu.dot_dimension_numbers<[1], [0], [0], [1], [0, 0, 1, 1], [], []>} : vector<8x256xf32>, vector<256x256xf32>, vector<8x256xf32> -> vector<8x256xf32>
    %179 = arith.addf %178, %4 : vector<8x256xf32>
    %180 = vector.extract_strided_slice %179 {offsets = [0, 128], sizes = [8, 128], strides = [1, 1]} : vector<8x256xf32> to vector<8x128xf32>
    %c0_101 = arith.constant 0 : index
    %c128_102 = arith.constant 128 : index
    %181 = vector.load %arg7[%c0_101, %c128_102] : memref<8x256xf32, #tpu.memory_space<vmem>>, vector<8x128xf32>
    tpu.vector_store %arg7[%c0_101, %c128_102], %180 {strides = array<i32>} : memref<8x256xf32, #tpu.memory_space<vmem>>, vector<8x128xf32>,
    %182 = vector.extract_strided_slice %179 {offsets = [0, 0], sizes = [8, 128], strides = [1, 1]} : vector<8x256xf32> to vector<8x128xf32>
    %cst_103 = arith.constant dense<0xFF800000> : vector<8xf32>
    %183 = vector.multi_reduction <maximumf>, %182, %cst_103 [1] : vector<8x128xf32> to vector<8xf32>
    %184 = vector.shape_cast %183 : vector<8xf32> to vector<8x1xf32>
    %185 = vector.broadcast %184 : vector<8x1xf32> to vector<8x128xf32>
    %186 = arith.subf %182, %185 : vector<8x128xf32>
    %187 = math.exp %186 : vector<8x128xf32>
    %cst_104 = arith.constant dense<0.000000e+00> : vector<8xf32>
    %188 = vector.multi_reduction <add>, %187, %cst_104 [1] : vector<8x128xf32> to vector<8xf32>
    %189 = vector.shape_cast %188 : vector<8xf32> to vector<8x1xf32>
    %190 = math.log %189 : vector<8x1xf32>
    %191 = vector.broadcast %190 : vector<8x1xf32> to vector<8x128xf32>
    %192 = arith.subf %186, %191 : vector<8x128xf32>
    %193 = arith.index_cast %c7_i32 : i32 to index
    %c0_105 = arith.constant 0 : index
    %c0_106 = arith.constant 0 : index
    %194 = vector.load %arg5[%193, %c0_105, %c0_106] : memref<8x8x128xf32, #tpu.memory_space<vmem>>, vector<1x8x128xf32>
    %195 = vector.shape_cast %194 : vector<1x8x128xf32> to vector<8x128xf32>
    %196 = vector.shape_cast %192 : vector<8x128xf32> to vector<1x8x128xf32>
    tpu.vector_store %arg5[%193, %c0_105, %c0_106], %196 {strides = array<i32>} : memref<8x8x128xf32, #tpu.memory_space<vmem>>, vector<1x8x128xf32>,
    %c8_i32 = arith.constant 8 : i32
    %c0_i32_107 = arith.constant 0 : i32
    %197 = arith.cmpi eq, %arg0, %c0_i32_107 : i32
    %198 = arith.extui %197 : i1 to i32
    %c0_i32_108 = arith.constant 0 : i32
    %199 = arith.cmpi ne, %198, %c0_i32_108 : i32
    scf.if %199 {
      %c0_109 = arith.constant 0 : index
      %c128_110 = arith.constant 128 : index
      %200 = vector.load %arg7[%c0_109, %c128_110] : memref<8x256xf32, #tpu.memory_space<vmem>>, vector<8x128xf32>
      %c0_111 = arith.constant 0 : index
      %c0_112 = arith.constant 0 : index
      %201 = vector.load %arg6[%c0_111, %c0_112] : memref<8x128xf32, #tpu.memory_space<vmem>>, vector<8x128xf32>
      tpu.vector_store %arg6[%c0_111, %c0_112], %200 {strides = array<i32>} : memref<8x128xf32, #tpu.memory_space<vmem>>, vector<8x128xf32>,
    } else {
    }
    return
  }
  func.func @transform_0(%arg0: i32) -> (i32, i32, i32) {
    %c0_i32 = arith.constant 0 : i32
    %c0_i32_0 = arith.constant 0 : i32
    %c0_i32_1 = arith.constant 0 : i32
    return %arg0, %c0_i32, %c0_i32_0 : i32, i32, i32
  }
  func.func @transform_1(%arg0: i32) -> (i32, i32) {
    %c0_i32 = arith.constant 0 : i32
    %c0_i32_0 = arith.constant 0 : i32
    %c0_i32_1 = arith.constant 0 : i32
    return %c0_i32, %c0_i32_0 : i32, i32
  }
  func.func @transform_2(%arg0: i32) -> (i32, i32) {
    %c0_i32 = arith.constant 0 : i32
    %c0_i32_0 = arith.constant 0 : i32
    %c0_i32_1 = arith.constant 0 : i32
    return %c0_i32, %c0_i32_0 : i32, i32
  }
  func.func @transform_3(%arg0: i32) -> (i32, i32) {
    %c0_i32 = arith.constant 0 : i32
    %c0_i32_0 = arith.constant 0 : i32
    %c0_i32_1 = arith.constant 0 : i32
    return %c0_i32, %c0_i32_0 : i32, i32
  }
  func.func @transform_4(%arg0: i32) -> (i32, i32, i32) {
    %c0_i32 = arith.constant 0 : i32
    %c0_i32_0 = arith.constant 0 : i32
    %c0_i32_1 = arith.constant 0 : i32
    return %arg0, %c0_i32, %c0_i32_0 : i32, i32, i32
  }
  func.func @transform_5(%arg0: i32) -> (i32, i32) {
    %c0_i32 = arith.constant 0 : i32
    %c0_i32_0 = arith.constant 0 : i32
    %c0_i32_1 = arith.constant 0 : i32
    return %c0_i32, %c0_i32_0 : i32, i32
  }
}

</mosaic_0001>

<llo_original>
// kernel: rnn_sequence_forward.1
$region0: #{rnn_sequence_forward.1}
  #allocation0 [shape = 'u32[]', space=smem, size = 0x4, offset = 0x4, fixed_abs, tag = 'smem constant byte address 0x4 - core index']
  #allocation1 [shape = 'u32[144,128]{1,0:T(1,128)}', space=vmem, size = 0x12000, scoped, tag = 'internal scratch']
  #allocation2 [shape = 'f32[8,256]{1,0:T(8,128)}', space=vmem, size = 0x2000, scoped, tag = 'scratch operand']
  %s0 = inlined_call_operand.vmem [shape: f32[8,8,128], index: 0, kind: input, shape index: {}]
  %s1 = inlined_call_operand.vmem [shape: f32[8,128], index: 1, kind: input, shape index: {}]
  %s2 = inlined_call_operand.vmem [shape: f32[256,256], index: 2, kind: input, shape index: {}]
  %s3 = inlined_call_operand.vmem [shape: f32[8,256], index: 3, kind: input, shape index: {}]
  %s4 = inlined_call_operand.vmem [shape: f32[8,8,128], index: 4, kind: output, shape index: {0}]
  %s5 = inlined_call_operand.vmem [shape: f32[8,128], index: 5, kind: output, shape index: {1}]
  %6 = xla_tuple %s4, %s5
  %s7 = sld [smem:[#allocation0]]
  $region42: #{rnn_sequence_forward.1} parent=0
    _
  %s9 = ssub.s32 1, %s7
  %s10 = scalar_select 0, %s9, %s7
  // Predicated region
  $region2: #{rnn_sequence_forward.1} parent=0 // pred_check
    _
  $region3: #{rnn_sequence_forward.1} parent=0 // pred_check_branch
    %12 = sbr.rel (0) target = $region5
  $region4: #{rnn_sequence_forward.1} parent=0 // pred_region
    _
  $region5: #{rnn_sequence_forward.1} parent=0 // pred_fallthru
    _
  // Predicated region
  $region6: #{rnn_sequence_forward.1} parent=0 // pred_check
    _
  $region7: #{rnn_sequence_forward.1} parent=0 // pred_check_branch
    %14 = sbr.rel (0) target = $region9
  $region8: #{rnn_sequence_forward.1} parent=0 // pred_region
    _
  $region9: #{rnn_sequence_forward.1} parent=0 // pred_fallthru
    _
  // Predicated region
  $region10: #{rnn_sequence_forward.1} parent=0 // pred_check
    _
  $region11: #{rnn_sequence_forward.1} parent=0 // pred_check_branch
    %16 = sbr.rel (0) target = $region13
  $region12: #{rnn_sequence_forward.1} parent=0 // pred_region
    _
  $region13: #{rnn_sequence_forward.1} parent=0 // pred_fallthru
    _
  // Predicated region
  $region14: #{rnn_sequence_forward.1} parent=0 // pred_check
    _
  $region15: #{rnn_sequence_forward.1} parent=0 // pred_check_branch
    %18 = sbr.rel (0) target = $region17
  $region16: #{rnn_sequence_forward.1} parent=0 // pred_region
    _
  $region17: #{rnn_sequence_forward.1} parent=0 // pred_fallthru
    _
  %p19 = scmp.eq.s32.totalorder 0, 0
  // Predicated region
  $region18: #{rnn_sequence_forward.1} parent=0 // pred_check
    %p20 = pneg %p19
  $region19: #{rnn_sequence_forward.1} parent=0 // pred_check_branch
    %22 = sbr.rel (%p20) target = $region21
  $region20: #{rnn_sequence_forward.1} parent=0 // pred_region
    %v23 = vld [vmem:[%s1] sm:$0xff]
    %24 = vst [vmem:[#allocation2 + $0x8] sm:$0xff] %v23
  $region21: #{rnn_sequence_forward.1} parent=0 // pred_fallthru
    _
  %v25 = vld [vmem:[%s2] sm:$0xff]
  %v26 = vld [vmem:[%s2 + $0x8] sm:$0xff]
  %v27 = vld [vmem:[%s2 + $0x10] sm:$0xff]
  %v28 = vld [vmem:[%s2 + $0x18] sm:$0xff]
  %v29 = vld [vmem:[%s2 + $0x20] sm:$0xff]
  %v30 = vld [vmem:[%s2 + $0x28] sm:$0xff]
  %v31 = vld [vmem:[%s2 + $0x30] sm:$0xff]
  %v32 = vld [vmem:[%s2 + $0x38] sm:$0xff]
  %v33 = vld [vmem:[%s2 + $0x40] sm:$0xff]
  %v34 = vld [vmem:[%s2 + $0x48] sm:$0xff]
  %v35 = vld [vmem:[%s2 + $0x50] sm:$0xff]
  %v36 = vld [vmem:[%s2 + $0x58] sm:$0xff]
  %v37 = vld [vmem:[%s2 + $0x60] sm:$0xff]
  %v38 = vld [vmem:[%s2 + $0x68] sm:$0xff]
  %v39 = vld [vmem:[%s2 + $0x70] sm:$0xff]
  %v40 = vld [vmem:[%s2 + $0x78] sm:$0xff]
  %v41 = vld [vmem:[%s2 + $0x80] sm:$0xff]
  %v42 = vld [vmem:[%s2 + $0x88] sm:$0xff]
  %v43 = vld [vmem:[%s2 + $0x90] sm:$0xff]
  %v44 = vld [vmem:[%s2 + $0x98] sm:$0xff]
  %v45 = vld [vmem:[%s2 + $0xa0] sm:$0xff]
  %v46 = vld [vmem:[%s2 + $0xa8] sm:$0xff]
  %v47 = vld [vmem:[%s2 + $0xb0] sm:$0xff]
  %v48 = vld [vmem:[%s2 + $0xb8] sm:$0xff]
  %v49 = vld [vmem:[%s2 + $0xc0] sm:$0xff]
  %v50 = vld [vmem:[%s2 + $0xc8] sm:$0xff]
  %v51 = vld [vmem:[%s2 + $0xd0] sm:$0xff]
  %v52 = vld [vmem:[%s2 + $0xd8] sm:$0xff]
  %v53 = vld [vmem:[%s2 + $0xe0] sm:$0xff]
  %v54 = vld [vmem:[%s2 + $0xe8] sm:$0xff]
  %v55 = vld [vmem:[%s2 + $0xf0] sm:$0xff]
  %v56 = vld [vmem:[%s2 + $0xf8] sm:$0xff]
  %v57 = vld [vmem:[%s2 + $0x100] sm:$0xff]
  %v58 = vld [vmem:[%s2 + $0x108] sm:$0xff]
  %v59 = vld [vmem:[%s2 + $0x110] sm:$0xff]
  %v60 = vld [vmem:[%s2 + $0x118] sm:$0xff]
  %v61 = vld [vmem:[%s2 + $0x120] sm:$0xff]
  %v62 = vld [vmem:[%s2 + $0x128] sm:$0xff]
  %v63 = vld [vmem:[%s2 + $0x130] sm:$0xff]
  %v64 = vld [vmem:[%s2 + $0x138] sm:$0xff]
  %v65 = vld [vmem:[%s2 + $0x140] sm:$0xff]
  %v66 = vld [vmem:[%s2 + $0x148] sm:$0xff]
  %v67 = vld [vmem:[%s2 + $0x150] sm:$0xff]
  %v68 = vld [vmem:[%s2 + $0x158] sm:$0xff]
  %v69 = vld [vmem:[%s2 + $0x160] sm:$0xff]
  %v70 = vld [vmem:[%s2 + $0x168] sm:$0xff]
  %v71 = vld [vmem:[%s2 + $0x170] sm:$0xff]
  %v72 = vld [vmem:[%s2 + $0x178] sm:$0xff]
  %v73 = vld [vmem:[%s2 + $0x180] sm:$0xff]
  %v74 = vld [vmem:[%s2 + $0x188] sm:$0xff]
  %v75 = vld [vmem:[%s2 + $0x190] sm:$0xff]
  %v76 = vld [vmem:[%s2 + $0x198] sm:$0xff]
  %v77 = vld [vmem:[%s2 + $0x1a0] sm:$0xff]
  %v78 = vld [vmem:[%s2 + $0x1a8] sm:$0xff]
  %v79 = vld [vmem:[%s2 + $0x1b0] sm:$0xff]
  %v80 = vld [vmem:[%s2 + $0x1b8] sm:$0xff]
  %v81 = vld [vmem:[%s2 + $0x1c0] sm:$0xff]
  %v82 = vld [vmem:[%s2 + $0x1c8] sm:$0xff]
  %v83 = vld [vmem:[%s2 + $0x1d0] sm:$0xff]
  %v84 = vld [vmem:[%s2 + $0x1d8] sm:$0xff]
  %v85 = vld [vmem:[%s2 + $0x1e0] sm:$0xff]
  %v86 = vld [vmem:[%s2 + $0x1e8] sm:$0xff]
  %v87 = vld [vmem:[%s2 + $0x1f0] sm:$0xff]
  %v88 = vld [vmem:[%s2 + $0x1f8] sm:$0xff]
  %v89 = vld [vmem:[%s3] sm:$0xff]
  %v90 = vld [vmem:[%s3 + $0x8] sm:$0xff]
  %v91 = vld [vmem:[%s0] sm:$0xff]
  %92 = vst [vmem:[#allocation2] sm:$0xff] %v91
  %v93 = vld [vmem:[#allocation2] sm:$0xff]
  %v94 = vld [vmem:[#allocation2 + $0x8] sm:$0xff]
  %95 = vmatprep.subr.mxu0 %v56
  %96 = vmatpush1.msra.mxu0 %v55
  %97 = vmatprep.subr.mxu0 %v54
  %98 = vmatpush1.msra.mxu0 %v53
  %99 = vmatprep.subr.mxu0 %v52
  %100 = vmatpush1.msra.mxu0 %v51
  %101 = vmatprep.subr.mxu0 %v50
  %102 = vmatpush1.msra.mxu0 %v49
  %103 = vmatprep.subr.mxu0 %v48
  %104 = vmatpush1.msra.mxu0 %v47
  %105 = vmatprep.subr.mxu0 %v46
  %106 = vmatpush1.msra.mxu0 %v45
  %107 = vmatprep.subr.mxu0 %v44
  %108 = vmatpush1.msra.mxu0 %v43
  %109 = vmatprep.subr.mxu0 %v42
  %110 = vmatpush1.msra.mxu0 %v41
  %111 = vmatprep.subr.mxu0 %v40
  %112 = vmatpush1.msra.mxu0 %v39
  %113 = vmatprep.subr.mxu0 %v38
  %114 = vmatpush1.msra.mxu0 %v37
  %115 = vmatprep.subr.mxu0 %v36
  %116 = vmatpush1.msra.mxu0 %v35
  %117 = vmatprep.subr.mxu0 %v34
  %118 = vmatpush1.msra.mxu0 %v33
  %119 = vmatprep.subr.mxu0 %v32
  %120 = vmatpush1.msra.mxu0 %v31
  %121 = vmatprep.subr.mxu0 %v30
  %122 = vmatpush1.msra.mxu0 %v29
  %123 = vmatprep.subr.mxu0 %v28
  %124 = vmatpush1.msra.mxu0 %v27
  %125 = vmatprep.subr.mxu0 %v26
  %126 = vmatpush1.msra.mxu0 %v25
  %127 = vmatprep.subr.mxu0 %v88
  %128 = vmatpush2.msra.mxu0 %v87
  %129 = vmatprep.subr.mxu0 %v86
  %130 = vmatpush2.msra.mxu0 %v85
  %131 = vmatprep.subr.mxu0 %v84
  %132 = vmatpush2.msra.mxu0 %v83
  %133 = vmatprep.subr.mxu0 %v82
  %134 = vmatpush2.msra.mxu0 %v81
  %135 = vmatprep.subr.mxu0 %v80
  %136 = vmatpush2.msra.mxu0 %v79
  %137 = vmatprep.subr.mxu0 %v78
  %138 = vmatpush2.msra.mxu0 %v77
  %139 = vmatprep.subr.mxu0 %v76
  %140 = vmatpush2.msra.mxu0 %v75
  %141 = vmatprep.subr.mxu0 %v74
  %142 = vmatpush2.msra.mxu0 %v73
  %143 = vmatprep.subr.mxu0 %v72
  %144 = vmatpush2.msra.mxu0 %v71
  %145 = vmatprep.subr.mxu0 %v70
  %146 = vmatpush2.msra.mxu0 %v69
  %147 = vmatprep.subr.mxu0 %v68
  %148 = vmatpush2.msra.mxu0 %v67
  %149 = vmatprep.subr.mxu0 %v66
  %150 = vmatpush2.msra.mxu0 %v65
  %151 = vmatprep.subr.mxu0 %v64
  %152 = vmatpush2.msra.mxu0 %v63
  %153 = vmatprep.subr.mxu0 %v62
  %154 = vmatpush2.msra.mxu0 %v61
  %155 = vmatprep.subr.mxu0 %v60
  %156 = vmatpush2.msra.mxu0 %v59
  %157 = vmatprep.subr.mxu0 %v58
  %158 = vmatpush2.msra.mxu0 %v57
  %159 = vmatprep.mubr.f32.mxu0 %v94
  %160 = vmatmul.mubr.f32.gmra.mxu0 %v93
  %v161 = vpop.f32.mrf.mxu0
  %v162 = vadd.f32 %v89, %v161
  %v163 = vpop.f32.mrf.mxu0
  %v164 = vadd.f32 %v90, %v163
  %165 = vdwg.mxu0
  %166 = vst [vmem:[#allocation2 + $0x8] sm:$0xff] %v164
  %167 = vmax.xlane.f32.xlu0 %v162
  %v168 = vpop.xlane.xlu0 %167
  %v169 = vsub.f32 %v162, %v168
  %v170 = vmul.f32 %v169, 1.442695
  %v171 = vpow.pop %v170
  %172 = vadd.xlane.f32.xlu0 %v171
  %v173 = vpop.xlane.xlu0 %172
  %v174 = vlog2.pop %v173
  %v175 = vmul.f32 %v174, 0.6931472
  %v176 = vsub.f32 %v169, %v175
  %177 = vst [vmem:[%s4] sm:$0xff] %v176
  %s178 = scalar_lea.vmem %s0, 8
  %v179 = vld [vmem:[%s178] sm:$0xff]
  %180 = vst [vmem:[#allocation2] sm:$0xff] %v179
  %v181 = vld [vmem:[#allocation2] sm:$0xff]
  %v182 = vld [vmem:[#allocation2 + $0x8] sm:$0xff]
  %183 = vmatprep.subr.mxu0 %v56
  %184 = vmatpush1.msra.mxu0 %v55
  %185 = vmatprep.subr.mxu0 %v54
  %186 = vmatpush1.msra.mxu0 %v53
  %187 = vmatprep.subr.mxu0 %v52
  %188 = vmatpush1.msra.mxu0 %v51
  %189 = vmatprep.subr.mxu0 %v50
  %190 = vmatpush1.msra.mxu0 %v49
  %191 = vmatprep.subr.mxu0 %v48
  %192 = vmatpush1.msra.mxu0 %v47
  %193 = vmatprep.subr.mxu0 %v46
  %194 = vmatpush1.msra.mxu0 %v45
  %195 = vmatprep.subr.mxu0 %v44
  %196 = vmatpush1.msra.mxu0 %v43
  %197 = vmatprep.subr.mxu0 %v42
  %198 = vmatpush1.msra.mxu0 %v41
  %199 = vmatprep.subr.mxu0 %v40
  %200 = vmatpush1.msra.mxu0 %v39
  %201 = vmatprep.subr.mxu0 %v38
  %202 = vmatpush1.msra.mxu0 %v37
  %203 = vmatprep.subr.mxu0 %v36
  %204 = vmatpush1.msra.mxu0 %v35
  %205 = vmatprep.subr.mxu0 %v34
  %206 = vmatpush1.msra.mxu0 %v33
  %207 = vmatprep.subr.mxu0 %v32
  %208 = vmatpush1.msra.mxu0 %v31
  %209 = vmatprep.subr.mxu0 %v30
  %210 = vmatpush1.msra.mxu0 %v29
  %211 = vmatprep.subr.mxu0 %v28
  %212 = vmatpush1.msra.mxu0 %v27
  %213 = vmatprep.subr.mxu0 %v26
  %214 = vmatpush1.msra.mxu0 %v25
  %215 = vmatprep.subr.mxu0 %v88
  %216 = vmatpush2.msra.mxu0 %v87
  %217 = vmatprep.subr.mxu0 %v86
  %218 = vmatpush2.msra.mxu0 %v85
  %219 = vmatprep.subr.mxu0 %v84
  %220 = vmatpush2.msra.mxu0 %v83
  %221 = vmatprep.subr.mxu0 %v82
  %222 = vmatpush2.msra.mxu0 %v81
  %223 = vmatprep.subr.mxu0 %v80
  %224 = vmatpush2.msra.mxu0 %v79
  %225 = vmatprep.subr.mxu0 %v78
  %226 = vmatpush2.msra.mxu0 %v77
  %227 = vmatprep.subr.mxu0 %v76
  %228 = vmatpush2.msra.mxu0 %v75
  %229 = vmatprep.subr.mxu0 %v74
  %230 = vmatpush2.msra.mxu0 %v73
  %231 = vmatprep.subr.mxu0 %v72
  %232 = vmatpush2.msra.mxu0 %v71
  %233 = vmatprep.subr.mxu0 %v70
  %234 = vmatpush2.msra.mxu0 %v69
  %235 = vmatprep.subr.mxu0 %v68
  %236 = vmatpush2.msra.mxu0 %v67
  %237 = vmatprep.subr.mxu0 %v66
  %238 = vmatpush2.msra.mxu0 %v65
  %239 = vmatprep.subr.mxu0 %v64
  %240 = vmatpush2.msra.mxu0 %v63
  %241 = vmatprep.subr.mxu0 %v62
  %242 = vmatpush2.msra.mxu0 %v61
  %243 = vmatprep.subr.mxu0 %v60
  %244 = vmatpush2.msra.mxu0 %v59
  %245 = vmatprep.subr.mxu0 %v58
  %246 = vmatpush2.msra.mxu0 %v57
  %247 = vmatprep.mubr.f32.mxu0 %v182
  %248 = vmatmul.mubr.f32.gmra.mxu0 %v181
  %v249 = vpop.f32.mrf.mxu0
  %v250 = vadd.f32 %v89, %v249
  %v251 = vpop.f32.mrf.mxu0
  %v252 = vadd.f32 %v90, %v251
  %253 = vdwg.mxu0
  %254 = vst [vmem:[#allocation2 + $0x8] sm:$0xff] %v252
  %255 = vmax.xlane.f32.xlu0 %v250
  %v256 = vpop.xlane.xlu0 %255
  %v257 = vsub.f32 %v250, %v256
  %v258 = vmul.f32 %v257, 1.442695
  %v259 = vpow.pop %v258
  %260 = vadd.xlane.f32.xlu0 %v259
  %v261 = vpop.xlane.xlu0 %260
  %v262 = vlog2.pop %v261
  %v263 = vmul.f32 %v262, 0.6931472
  %v264 = vsub.f32 %v257, %v263
  %s265 = scalar_lea.vmem %s4, 8
  %266 = vst [vmem:[%s265] sm:$0xff] %v264
  %s267 = scalar_lea.vmem %s0, 16
  %v268 = vld [vmem:[%s267] sm:$0xff]
  %269 = vst [vmem:[#allocation2] sm:$0xff] %v268
  %v270 = vld [vmem:[#allocation2] sm:$0xff]
  %v271 = vld [vmem:[#allocation2 + $0x8] sm:$0xff]
  %272 = vmatprep.subr.mxu0 %v56
  %273 = vmatpush1.msra.mxu0 %v55
  %274 = vmatprep.subr.mxu0 %v54
  %275 = vmatpush1.msra.mxu0 %v53
  %276 = vmatprep.subr.mxu0 %v52
  %277 = vmatpush1.msra.mxu0 %v51
  %278 = vmatprep.subr.mxu0 %v50
  %279 = vmatpush1.msra.mxu0 %v49
  %280 = vmatprep.subr.mxu0 %v48
  %281 = vmatpush1.msra.mxu0 %v47
  %282 = vmatprep.subr.mxu0 %v46
  %283 = vmatpush1.msra.mxu0 %v45
  %284 = vmatprep.subr.mxu0 %v44
  %285 = vmatpush1.msra.mxu0 %v43
  %286 = vmatprep.subr.mxu0 %v42
  %287 = vmatpush1.msra.mxu0 %v41
  %288 = vmatprep.subr.mxu0 %v40
  %289 = vmatpush1.msra.mxu0 %v39
  %290 = vmatprep.subr.mxu0 %v38
  %291 = vmatpush1.msra.mxu0 %v37
  %292 = vmatprep.subr.mxu0 %v36
  %293 = vmatpush1.msra.mxu0 %v35
  %294 = vmatprep.subr.mxu0 %v34
  %295 = vmatpush1.msra.mxu0 %v33
  %296 = vmatprep.subr.mxu0 %v32
  %297 = vmatpush1.msra.mxu0 %v31
  %298 = vmatprep.subr.mxu0 %v30
  %299 = vmatpush1.msra.mxu0 %v29
  %300 = vmatprep.subr.mxu0 %v28
  %301 = vmatpush1.msra.mxu0 %v27
  %302 = vmatprep.subr.mxu0 %v26
  %303 = vmatpush1.msra.mxu0 %v25
  %304 = vmatprep.subr.mxu0 %v88
  %305 = vmatpush2.msra.mxu0 %v87
  %306 = vmatprep.subr.mxu0 %v86
  %307 = vmatpush2.msra.mxu0 %v85
  %308 = vmatprep.subr.mxu0 %v84
  %309 = vmatpush2.msra.mxu0 %v83
  %310 = vmatprep.subr.mxu0 %v82
  %311 = vmatpush2.msra.mxu0 %v81
  %312 = vmatprep.subr.mxu0 %v80
  %313 = vmatpush2.msra.mxu0 %v79
  %314 = vmatprep.subr.mxu0 %v78
  %315 = vmatpush2.msra.mxu0 %v77
  %316 = vmatprep.subr.mxu0 %v76
  %317 = vmatpush2.msra.mxu0 %v75
  %318 = vmatprep.subr.mxu0 %v74
  %319 = vmatpush2.msra.mxu0 %v73
  %320 = vmatprep.subr.mxu0 %v72
  %321 = vmatpush2.msra.mxu0 %v71
  %322 = vmatprep.subr.mxu0 %v70
  %323 = vmatpush2.msra.mxu0 %v69
  %324 = vmatprep.subr.mxu0 %v68
  %325 = vmatpush2.msra.mxu0 %v67
  %326 = vmatprep.subr.mxu0 %v66
  %327 = vmatpush2.msra.mxu0 %v65
  %328 = vmatprep.subr.mxu0 %v64
  %329 = vmatpush2.msra.mxu0 %v63
  %330 = vmatprep.subr.mxu0 %v62
  %331 = vmatpush2.msra.mxu0 %v61
  %332 = vmatprep.subr.mxu0 %v60
  %333 = vmatpush2.msra.mxu0 %v59
  %334 = vmatprep.subr.mxu0 %v58
  %335 = vmatpush2.msra.mxu0 %v57
  %336 = vmatprep.mubr.f32.mxu0 %v271
  %337 = vmatmul.mubr.f32.gmra.mxu0 %v270
  %v338 = vpop.f32.mrf.mxu0
  %v339 = vadd.f32 %v89, %v338
  %v340 = vpop.f32.mrf.mxu0
  %v341 = vadd.f32 %v90, %v340
  %342 = vdwg.mxu0
  %343 = vst [vmem:[#allocation2 + $0x8] sm:$0xff] %v341
  %344 = vmax.xlane.f32.xlu0 %v339
  %v345 = vpop.xlane.xlu0 %344
  %v346 = vsub.f32 %v339, %v345
  %v347 = vmul.f32 %v346, 1.442695
  %v348 = vpow.pop %v347
  %349 = vadd.xlane.f32.xlu0 %v348
  %v350 = vpop.xlane.xlu0 %349
  %v351 = vlog2.pop %v350
  %v352 = vmul.f32 %v351, 0.6931472
  %v353 = vsub.f32 %v346, %v352
  %s354 = scalar_lea.vmem %s4, 16
  %355 = vst [vmem:[%s354] sm:$0xff] %v353
  %s356 = scalar_lea.vmem %s0, 24
  %v357 = vld [vmem:[%s356] sm:$0xff]
  %358 = vst [vmem:[#allocation2] sm:$0xff] %v357
  %v359 = vld [vmem:[#allocation2] sm:$0xff]
  %v360 = vld [vmem:[#allocation2 + $0x8] sm:$0xff]
  %361 = vmatprep.subr.mxu0 %v56
  %362 = vmatpush1.msra.mxu0 %v55
  %363 = vmatprep.subr.mxu0 %v54
  %364 = vmatpush1.msra.mxu0 %v53
  %365 = vmatprep.subr.mxu0 %v52
  %366 = vmatpush1.msra.mxu0 %v51
  %367 = vmatprep.subr.mxu0 %v50
  %368 = vmatpush1.msra.mxu0 %v49
  %369 = vmatprep.subr.mxu0 %v48
  %370 = vmatpush1.msra.mxu0 %v47
  %371 = vmatprep.subr.mxu0 %v46
  %372 = vmatpush1.msra.mxu0 %v45
  %373 = vmatprep.subr.mxu0 %v44
  %374 = vmatpush1.msra.mxu0 %v43
  %375 = vmatprep.subr.mxu0 %v42
  %376 = vmatpush1.msra.mxu0 %v41
  %377 = vmatprep.subr.mxu0 %v40
  %378 = vmatpush1.msra.mxu0 %v39
  %379 = vmatprep.subr.mxu0 %v38
  %380 = vmatpush1.msra.mxu0 %v37
  %381 = vmatprep.subr.mxu0 %v36
  %382 = vmatpush1.msra.mxu0 %v35
  %383 = vmatprep.subr.mxu0 %v34
  %384 = vmatpush1.msra.mxu0 %v33
  %385 = vmatprep.subr.mxu0 %v32
  %386 = vmatpush1.msra.mxu0 %v31
  %387 = vmatprep.subr.mxu0 %v30
  %388 = vmatpush1.msra.mxu0 %v29
  %389 = vmatprep.subr.mxu0 %v28
  %390 = vmatpush1.msra.mxu0 %v27
  %391 = vmatprep.subr.mxu0 %v26
  %392 = vmatpush1.msra.mxu0 %v25
  %393 = vmatprep.subr.mxu0 %v88
  %394 = vmatpush2.msra.mxu0 %v87
  %395 = vmatprep.subr.mxu0 %v86
  %396 = vmatpush2.msra.mxu0 %v85
  %397 = vmatprep.subr.mxu0 %v84
  %398 = vmatpush2.msra.mxu0 %v83
  %399 = vmatprep.subr.mxu0 %v82
  %400 = vmatpush2.msra.mxu0 %v81
  %401 = vmatprep.subr.mxu0 %v80
  %402 = vmatpush2.msra.mxu0 %v79
  %403 = vmatprep.subr.mxu0 %v78
  %404 = vmatpush2.msra.mxu0 %v77
  %405 = vmatprep.subr.mxu0 %v76
  %406 = vmatpush2.msra.mxu0 %v75
  %407 = vmatprep.subr.mxu0 %v74
  %408 = vmatpush2.msra.mxu0 %v73
  %409 = vmatprep.subr.mxu0 %v72
  %410 = vmatpush2.msra.mxu0 %v71
  %411 = vmatprep.subr.mxu0 %v70
  %412 = vmatpush2.msra.mxu0 %v69
  %413 = vmatprep.subr.mxu0 %v68
  %414 = vmatpush2.msra.mxu0 %v67
  %415 = vmatprep.subr.mxu0 %v66
  %416 = vmatpush2.msra.mxu0 %v65
  %417 = vmatprep.subr.mxu0 %v64
  %418 = vmatpush2.msra.mxu0 %v63
  %419 = vmatprep.subr.mxu0 %v62
  %420 = vmatpush2.msra.mxu0 %v61
  %421 = vmatprep.subr.mxu0 %v60
  %422 = vmatpush2.msra.mxu0 %v59
  %423 = vmatprep.subr.mxu0 %v58
  %424 = vmatpush2.msra.mxu0 %v57
  %425 = vmatprep.mubr.f32.mxu0 %v360
  %426 = vmatmul.mubr.f32.gmra.mxu0 %v359
  %v427 = vpop.f32.mrf.mxu0
  %v428 = vadd.f32 %v89, %v427
  %v429 = vpop.f32.mrf.mxu0
  %v430 = vadd.f32 %v90, %v429
  %431 = vdwg.mxu0
  %432 = vst [vmem:[#allocation2 + $0x8] sm:$0xff] %v430
  %433 = vmax.xlane.f32.xlu0 %v428
  %v434 = vpop.xlane.xlu0 %433
  %v435 = vsub.f32 %v428, %v434
  %v436 = vmul.f32 %v435, 1.442695
  %v437 = vpow.pop %v436
  %438 = vadd.xlane.f32.xlu0 %v437
  %v439 = vpop.xlane.xlu0 %438
  %v440 = vlog2.pop %v439
  %v441 = vmul.f32 %v440, 0.6931472
  %v442 = vsub.f32 %v435, %v441
  %s443 = scalar_lea.vmem %s4, 24
  %444 = vst [vmem:[%s443] sm:$0xff] %v442
  %s445 = scalar_lea.vmem %s0, 32
  %v446 = vld [vmem:[%s445] sm:$0xff]
  %447 = vst [vmem:[#allocation2] sm:$0xff] %v446
  %v448 = vld [vmem:[#allocation2] sm:$0xff]
  %v449 = vld [vmem:[#allocation2 + $0x8] sm:$0xff]
  %450 = vmatprep.subr.mxu0 %v56
  %451 = vmatpush1.msra.mxu0 %v55
  %452 = vmatprep.subr.mxu0 %v54
  %453 = vmatpush1.msra.mxu0 %v53
  %454 = vmatprep.subr.mxu0 %v52
  %455 = vmatpush1.msra.mxu0 %v51
  %456 = vmatprep.subr.mxu0 %v50
  %457 = vmatpush1.msra.mxu0 %v49
  %458 = vmatprep.subr.mxu0 %v48
  %459 = vmatpush1.msra.mxu0 %v47
  %460 = vmatprep.subr.mxu0 %v46
  %461 = vmatpush1.msra.mxu0 %v45
  %462 = vmatprep.subr.mxu0 %v44
  %463 = vmatpush1.msra.mxu0 %v43
  %464 = vmatprep.subr.mxu0 %v42
  %465 = vmatpush1.msra.mxu0 %v41
  %466 = vmatprep.subr.mxu0 %v40
  %467 = vmatpush1.msra.mxu0 %v39
  %468 = vmatprep.subr.mxu0 %v38
  %469 = vmatpush1.msra.mxu0 %v37
  %470 = vmatprep.subr.mxu0 %v36
  %471 = vmatpush1.msra.mxu0 %v35
  %472 = vmatprep.subr.mxu0 %v34
  %473 = vmatpush1.msra.mxu0 %v33
  %474 = vmatprep.subr.mxu0 %v32
  %475 = vmatpush1.msra.mxu0 %v31
  %476 = vmatprep.subr.mxu0 %v30
  %477 = vmatpush1.msra.mxu0 %v29
  %478 = vmatprep.subr.mxu0 %v28
  %479 = vmatpush1.msra.mxu0 %v27
  %480 = vmatprep.subr.mxu0 %v26
  %481 = vmatpush1.msra.mxu0 %v25
  %482 = vmatprep.subr.mxu0 %v88
  %483 = vmatpush2.msra.mxu0 %v87
  %484 = vmatprep.subr.mxu0 %v86
  %485 = vmatpush2.msra.mxu0 %v85
  %486 = vmatprep.subr.mxu0 %v84
  %487 = vmatpush2.msra.mxu0 %v83
  %488 = vmatprep.subr.mxu0 %v82
  %489 = vmatpush2.msra.mxu0 %v81
  %490 = vmatprep.subr.mxu0 %v80
  %491 = vmatpush2.msra.mxu0 %v79
  %492 = vmatprep.subr.mxu0 %v78
  %493 = vmatpush2.msra.mxu0 %v77
  %494 = vmatprep.subr.mxu0 %v76
  %495 = vmatpush2.msra.mxu0 %v75
  %496 = vmatprep.subr.mxu0 %v74
  %497 = vmatpush2.msra.mxu0 %v73
  %498 = vmatprep.subr.mxu0 %v72
  %499 = vmatpush2.msra.mxu0 %v71
  %500 = vmatprep.subr.mxu0 %v70
  %501 = vmatpush2.msra.mxu0 %v69
  %502 = vmatprep.subr.mxu0 %v68
  %503 = vmatpush2.msra.mxu0 %v67
  %504 = vmatprep.subr.mxu0 %v66
  %505 = vmatpush2.msra.mxu0 %v65
  %506 = vmatprep.subr.mxu0 %v64
  %507 = vmatpush2.msra.mxu0 %v63
  %508 = vmatprep.subr.mxu0 %v62
  %509 = vmatpush2.msra.mxu0 %v61
  %510 = vmatprep.subr.mxu0 %v60
  %511 = vmatpush2.msra.mxu0 %v59
  %512 = vmatprep.subr.mxu0 %v58
  %513 = vmatpush2.msra.mxu0 %v57
  %514 = vmatprep.mubr.f32.mxu0 %v449
  %515 = vmatmul.mubr.f32.gmra.mxu0 %v448
  %v516 = vpop.f32.mrf.mxu0
  %v517 = vadd.f32 %v89, %v516
  %v518 = vpop.f32.mrf.mxu0
  %v519 = vadd.f32 %v90, %v518
  %520 = vdwg.mxu0
  %521 = vst [vmem:[#allocation2 + $0x8] sm:$0xff] %v519
  %522 = vmax.xlane.f32.xlu0 %v517
  %v523 = vpop.xlane.xlu0 %522
  %v524 = vsub.f32 %v517, %v523
  %v525 = vmul.f32 %v524, 1.442695
  %v526 = vpow.pop %v525
  %527 = vadd.xlane.f32.xlu0 %v526
  %v528 = vpop.xlane.xlu0 %527
  %v529 = vlog2.pop %v528
  %v530 = vmul.f32 %v529, 0.6931472
  %v531 = vsub.f32 %v524, %v530
  %s532 = scalar_lea.vmem %s4, 32
  %533 = vst [vmem:[%s532] sm:$0xff] %v531
  %s534 = scalar_lea.vmem %s0, 40
  %v535 = vld [vmem:[%s534] sm:$0xff]
  %536 = vst [vmem:[#allocation2] sm:$0xff] %v535
  %v537 = vld [vmem:[#allocation2] sm:$0xff]
  %v538 = vld [vmem:[#allocation2 + $0x8] sm:$0xff]
  %539 = vmatprep.subr.mxu0 %v56
  %540 = vmatpush1.msra.mxu0 %v55
  %541 = vmatprep.subr.mxu0 %v54
  %542 = vmatpush1.msra.mxu0 %v53
  %543 = vmatprep.subr.mxu0 %v52
  %544 = vmatpush1.msra.mxu0 %v51
  %545 = vmatprep.subr.mxu0 %v50
  %546 = vmatpush1.msra.mxu0 %v49
  %547 = vmatprep.subr.mxu0 %v48
  %548 = vmatpush1.msra.mxu0 %v47
  %549 = vmatprep.subr.mxu0 %v46
  %550 = vmatpush1.msra.mxu0 %v45
  %551 = vmatprep.subr.mxu0 %v44
  %552 = vmatpush1.msra.mxu0 %v43
  %553 = vmatprep.subr.mxu0 %v42
  %554 = vmatpush1.msra.mxu0 %v41
  %555 = vmatprep.subr.mxu0 %v40
  %556 = vmatpush1.msra.mxu0 %v39
  %557 = vmatprep.subr.mxu0 %v38
  %558 = vmatpush1.msra.mxu0 %v37
  %559 = vmatprep.subr.mxu0 %v36
  %560 = vmatpush1.msra.mxu0 %v35
  %561 = vmatprep.subr.mxu0 %v34
  %562 = vmatpush1.msra.mxu0 %v33
  %563 = vmatprep.subr.mxu0 %v32
  %564 = vmatpush1.msra.mxu0 %v31
  %565 = vmatprep.subr.mxu0 %v30
  %566 = vmatpush1.msra.mxu0 %v29
  %567 = vmatprep.subr.mxu0 %v28
  %568 = vmatpush1.msra.mxu0 %v27
  %569 = vmatprep.subr.mxu0 %v26
  %570 = vmatpush1.msra.mxu0 %v25
  %571 = vmatprep.subr.mxu0 %v88
  %572 = vmatpush2.msra.mxu0 %v87
  %573 = vmatprep.subr.mxu0 %v86
  %574 = vmatpush2.msra.mxu0 %v85
  %575 = vmatprep.subr.mxu0 %v84
  %576 = vmatpush2.msra.mxu0 %v83
  %577 = vmatprep.subr.mxu0 %v82
  %578 = vmatpush2.msra.mxu0 %v81
  %579 = vmatprep.subr.mxu0 %v80
  %580 = vmatpush2.msra.mxu0 %v79
  %581 = vmatprep.subr.mxu0 %v78
  %582 = vmatpush2.msra.mxu0 %v77
  %583 = vmatprep.subr.mxu0 %v76
  %584 = vmatpush2.msra.mxu0 %v75
  %585 = vmatprep.subr.mxu0 %v74
  %586 = vmatpush2.msra.mxu0 %v73
  %587 = vmatprep.subr.mxu0 %v72
  %588 = vmatpush2.msra.mxu0 %v71
  %589 = vmatprep.subr.mxu0 %v70
  %590 = vmatpush2.msra.mxu0 %v69
  %591 = vmatprep.subr.mxu0 %v68
  %592 = vmatpush2.msra.mxu0 %v67
  %593 = vmatprep.subr.mxu0 %v66
  %594 = vmatpush2.msra.mxu0 %v65
  %595 = vmatprep.subr.mxu0 %v64
  %596 = vmatpush2.msra.mxu0 %v63
  %597 = vmatprep.subr.mxu0 %v62
  %598 = vmatpush2.msra.mxu0 %v61
  %599 = vmatprep.subr.mxu0 %v60
  %600 = vmatpush2.msra.mxu0 %v59
  %601 = vmatprep.subr.mxu0 %v58
  %602 = vmatpush2.msra.mxu0 %v57
  %603 = vmatprep.mubr.f32.mxu0 %v538
  %604 = vmatmul.mubr.f32.gmra.mxu0 %v537
  %v605 = vpop.f32.mrf.mxu0
  %v606 = vadd.f32 %v89, %v605
  %v607 = vpop.f32.mrf.mxu0
  %v608 = vadd.f32 %v90, %v607
  %609 = vdwg.mxu0
  %610 = vst [vmem:[#allocation2 + $0x8] sm:$0xff] %v608
  %611 = vmax.xlane.f32.xlu0 %v606
  %v612 = vpop.xlane.xlu0 %611
  %v613 = vsub.f32 %v606, %v612
  %v614 = vmul.f32 %v613, 1.442695
  %v615 = vpow.pop %v614
  %616 = vadd.xlane.f32.xlu0 %v615
  %v617 = vpop.xlane.xlu0 %616
  %v618 = vlog2.pop %v617
  %v619 = vmul.f32 %v618, 0.6931472
  %v620 = vsub.f32 %v613, %v619
  %s621 = scalar_lea.vmem %s4, 40
  %622 = vst [vmem:[%s621] sm:$0xff] %v620
  %s623 = scalar_lea.vmem %s0, 48
  %v624 = vld [vmem:[%s623] sm:$0xff]
  %625 = vst [vmem:[#allocation2] sm:$0xff] %v624
  %v626 = vld [vmem:[#allocation2] sm:$0xff]
  %v627 = vld [vmem:[#allocation2 + $0x8] sm:$0xff]
  %628 = vmatprep.subr.mxu0 %v56
  %629 = vmatpush1.msra.mxu0 %v55
  %630 = vmatprep.subr.mxu0 %v54
  %631 = vmatpush1.msra.mxu0 %v53
  %632 = vmatprep.subr.mxu0 %v52
  %633 = vmatpush1.msra.mxu0 %v51
  %634 = vmatprep.subr.mxu0 %v50
  %635 = vmatpush1.msra.mxu0 %v49
  %636 = vmatprep.subr.mxu0 %v48
  %637 = vmatpush1.msra.mxu0 %v47
  %638 = vmatprep.subr.mxu0 %v46
  %639 = vmatpush1.msra.mxu0 %v45
  %640 = vmatprep.subr.mxu0 %v44
  %641 = vmatpush1.msra.mxu0 %v43
  %642 = vmatprep.subr.mxu0 %v42
  %643 = vmatpush1.msra.mxu0 %v41
  %644 = vmatprep.subr.mxu0 %v40
  %645 = vmatpush1.msra.mxu0 %v39
  %646 = vmatprep.subr.mxu0 %v38
  %647 = vmatpush1.msra.mxu0 %v37
  %648 = vmatprep.subr.mxu0 %v36
  %649 = vmatpush1.msra.mxu0 %v35
  %650 = vmatprep.subr.mxu0 %v34
  %651 = vmatpush1.msra.mxu0 %v33
  %652 = vmatprep.subr.mxu0 %v32
  %653 = vmatpush1.msra.mxu0 %v31
  %654 = vmatprep.subr.mxu0 %v30
  %655 = vmatpush1.msra.mxu0 %v29
  %656 = vmatprep.subr.mxu0 %v28
  %657 = vmatpush1.msra.mxu0 %v27
  %658 = vmatprep.subr.mxu0 %v26
  %659 = vmatpush1.msra.mxu0 %v25
  %660 = vmatprep.subr.mxu0 %v88
  %661 = vmatpush2.msra.mxu0 %v87
  %662 = vmatprep.subr.mxu0 %v86
  %663 = vmatpush2.msra.mxu0 %v85
  %664 = vmatprep.subr.mxu0 %v84
  %665 = vmatpush2.msra.mxu0 %v83
  %666 = vmatprep.subr.mxu0 %v82
  %667 = vmatpush2.msra.mxu0 %v81
  %668 = vmatprep.subr.mxu0 %v80
  %669 = vmatpush2.msra.mxu0 %v79
  %670 = vmatprep.subr.mxu0 %v78
  %671 = vmatpush2.msra.mxu0 %v77
  %672 = vmatprep.subr.mxu0 %v76
  %673 = vmatpush2.msra.mxu0 %v75
  %674 = vmatprep.subr.mxu0 %v74
  %675 = vmatpush2.msra.mxu0 %v73
  %676 = vmatprep.subr.mxu0 %v72
  %677 = vmatpush2.msra.mxu0 %v71
  %678 = vmatprep.subr.mxu0 %v70
  %679 = vmatpush2.msra.mxu0 %v69
  %680 = vmatprep.subr.mxu0 %v68
  %681 = vmatpush2.msra.mxu0 %v67
  %682 = vmatprep.subr.mxu0 %v66
  %683 = vmatpush2.msra.mxu0 %v65
  %684 = vmatprep.subr.mxu0 %v64
  %685 = vmatpush2.msra.mxu0 %v63
  %686 = vmatprep.subr.mxu0 %v62
  %687 = vmatpush2.msra.mxu0 %v61
  %688 = vmatprep.subr.mxu0 %v60
  %689 = vmatpush2.msra.mxu0 %v59
  %690 = vmatprep.subr.mxu0 %v58
  %691 = vmatpush2.msra.mxu0 %v57
  %692 = vmatprep.mubr.f32.mxu0 %v627
  %693 = vmatmul.mubr.f32.gmra.mxu0 %v626
  %v694 = vpop.f32.mrf.mxu0
  %v695 = vadd.f32 %v89, %v694
  %v696 = vpop.f32.mrf.mxu0
  %v697 = vadd.f32 %v90, %v696
  %698 = vdwg.mxu0
  %699 = vst [vmem:[#allocation2 + $0x8] sm:$0xff] %v697
  %700 = vmax.xlane.f32.xlu0 %v695
  %v701 = vpop.xlane.xlu0 %700
  %v702 = vsub.f32 %v695, %v701
  %v703 = vmul.f32 %v702, 1.442695
  %v704 = vpow.pop %v703
  %705 = vadd.xlane.f32.xlu0 %v704
  %v706 = vpop.xlane.xlu0 %705
  %v707 = vlog2.pop %v706
  %v708 = vmul.f32 %v707, 0.6931472
  %v709 = vsub.f32 %v702, %v708
  %s710 = scalar_lea.vmem %s4, 48
  %711 = vst [vmem:[%s710] sm:$0xff] %v709
  %s712 = scalar_lea.vmem %s0, 56
  %v713 = vld [vmem:[%s712] sm:$0xff]
  %714 = vst [vmem:[#allocation2] sm:$0xff] %v713
  %v715 = vld [vmem:[#allocation2] sm:$0xff]
  %v716 = vld [vmem:[#allocation2 + $0x8] sm:$0xff]
  %717 = vmatprep.subr.mxu0 %v56
  %718 = vmatpush1.msra.mxu0 %v55
  %719 = vmatprep.subr.mxu0 %v54
  %720 = vmatpush1.msra.mxu0 %v53
  %721 = vmatprep.subr.mxu0 %v52
  %722 = vmatpush1.msra.mxu0 %v51
  %723 = vmatprep.subr.mxu0 %v50
  %724 = vmatpush1.msra.mxu0 %v49
  %725 = vmatprep.subr.mxu0 %v48
  %726 = vmatpush1.msra.mxu0 %v47
  %727 = vmatprep.subr.mxu0 %v46
  %728 = vmatpush1.msra.mxu0 %v45
  %729 = vmatprep.subr.mxu0 %v44
  %730 = vmatpush1.msra.mxu0 %v43
  %731 = vmatprep.subr.mxu0 %v42
  %732 = vmatpush1.msra.mxu0 %v41
  %733 = vmatprep.subr.mxu0 %v40
  %734 = vmatpush1.msra.mxu0 %v39
  %735 = vmatprep.subr.mxu0 %v38
  %736 = vmatpush1.msra.mxu0 %v37
  %737 = vmatprep.subr.mxu0 %v36
  %738 = vmatpush1.msra.mxu0 %v35
  %739 = vmatprep.subr.mxu0 %v34
  %740 = vmatpush1.msra.mxu0 %v33
  %741 = vmatprep.subr.mxu0 %v32
  %742 = vmatpush1.msra.mxu0 %v31
  %743 = vmatprep.subr.mxu0 %v30
  %744 = vmatpush1.msra.mxu0 %v29
  %745 = vmatprep.subr.mxu0 %v28
  %746 = vmatpush1.msra.mxu0 %v27
  %747 = vmatprep.subr.mxu0 %v26
  %748 = vmatpush1.msra.mxu0 %v25
  %749 = vmatprep.subr.mxu0 %v88
  %750 = vmatpush2.msra.mxu0 %v87
  %751 = vmatprep.subr.mxu0 %v86
  %752 = vmatpush2.msra.mxu0 %v85
  %753 = vmatprep.subr.mxu0 %v84
  %754 = vmatpush2.msra.mxu0 %v83
  %755 = vmatprep.subr.mxu0 %v82
  %756 = vmatpush2.msra.mxu0 %v81
  %757 = vmatprep.subr.mxu0 %v80
  %758 = vmatpush2.msra.mxu0 %v79
  %759 = vmatprep.subr.mxu0 %v78
  %760 = vmatpush2.msra.mxu0 %v77
  %761 = vmatprep.subr.mxu0 %v76
  %762 = vmatpush2.msra.mxu0 %v75
  %763 = vmatprep.subr.mxu0 %v74
  %764 = vmatpush2.msra.mxu0 %v73
  %765 = vmatprep.subr.mxu0 %v72
  %766 = vmatpush2.msra.mxu0 %v71
  %767 = vmatprep.subr.mxu0 %v70
  %768 = vmatpush2.msra.mxu0 %v69
  %769 = vmatprep.subr.mxu0 %v68
  %770 = vmatpush2.msra.mxu0 %v67
  %771 = vmatprep.subr.mxu0 %v66
  %772 = vmatpush2.msra.mxu0 %v65
  %773 = vmatprep.subr.mxu0 %v64
  %774 = vmatpush2.msra.mxu0 %v63
  %775 = vmatprep.subr.mxu0 %v62
  %776 = vmatpush2.msra.mxu0 %v61
  %777 = vmatprep.subr.mxu0 %v60
  %778 = vmatpush2.msra.mxu0 %v59
  %779 = vmatprep.subr.mxu0 %v58
  %780 = vmatpush2.msra.mxu0 %v57
  %781 = vmatprep.mubr.f32.mxu0 %v716
  %782 = vmatmul.mubr.f32.gmra.mxu0 %v715
  %v783 = vpop.f32.mrf.mxu0
  %v784 = vadd.f32 %v89, %v783
  %v785 = vpop.f32.mrf.mxu0
  %v786 = vadd.f32 %v90, %v785
  %787 = vdwg.mxu0
  %788 = vst [vmem:[#allocation2 + $0x8] sm:$0xff] %v786
  %789 = vmax.xlane.f32.xlu0 %v784
  %v790 = vpop.xlane.xlu0 %789
  %v791 = vsub.f32 %v784, %v790
  %v792 = vmul.f32 %v791, 1.442695
  %v793 = vpow.pop %v792
  %794 = vadd.xlane.f32.xlu0 %v793
  %v795 = vpop.xlane.xlu0 %794
  %v796 = vlog2.pop %v795
  %v797 = vmul.f32 %v796, 0.6931472
  %v798 = vsub.f32 %v791, %v797
  %s799 = scalar_lea.vmem %s4, 56
  %800 = vst [vmem:[%s799] sm:$0xff] %v798
  // Predicated region
  $region22: #{rnn_sequence_forward.1} parent=0 // pred_check
    %p801 = pneg %p19
  $region23: #{rnn_sequence_forward.1} parent=0 // pred_check_branch
    %803 = sbr.rel (%p801) target = $region25
  $region24: #{rnn_sequence_forward.1} parent=0 // pred_region
    %v804 = vld [vmem:[#allocation2 + $0x8] sm:$0xff]
    %805 = vst [vmem:[%s5] sm:$0xff] %v804
  $region25: #{rnn_sequence_forward.1} parent=0 // pred_fallthru
    _
  // Predicated region
  $region26: #{rnn_sequence_forward.1} parent=0 // pred_check
    _
  $region27: #{rnn_sequence_forward.1} parent=0 // pred_check_branch
    %807 = sbr.rel (0) target = $region29
  $region28: #{rnn_sequence_forward.1} parent=0 // pred_region
    _
  $region29: #{rnn_sequence_forward.1} parent=0 // pred_fallthru
    _
  // Predicated region
  $region30: #{rnn_sequence_forward.1} parent=0 // pred_check
    _
  $region31: #{rnn_sequence_forward.1} parent=0 // pred_check_branch
    %809 = sbr.rel (0) target = $region33
  $region32: #{rnn_sequence_forward.1} parent=0 // pred_region
    _
  $region33: #{rnn_sequence_forward.1} parent=0 // pred_fallthru
    _
  // Predicated region
  $region34: #{rnn_sequence_forward.1} parent=0 // pred_check
    _
  $region35: #{rnn_sequence_forward.1} parent=0 // pred_check_branch
    %811 = sbr.rel (0) target = $region37
  $region36: #{rnn_sequence_forward.1} parent=0 // pred_region
    _
  $region37: #{rnn_sequence_forward.1} parent=0 // pred_fallthru
    _
  // Predicated region
  $region38: #{rnn_sequence_forward.1} parent=0 // pred_check
    _
  $region39: #{rnn_sequence_forward.1} parent=0 // pred_check_branch
    %813 = sbr.rel (0) target = $region41
  $region40: #{rnn_sequence_forward.1} parent=0 // pred_region
    _
  $region41: #{rnn_sequence_forward.1} parent=0 // pred_fallthru
    _

</llo_original>
